<compile_context>
chip_gen: v5e
topology: v5e:2x2
jax: 0.10.0
libtpu: 0.0.40
codegen_flags: <defaults>
</compile_context>

<pallas_src>
import functools

import jax
import jax.numpy as jnp
from jax.experimental import pallas as pl
from jax.experimental.pallas import tpu as pltpu

EPS = 1e-5  # nn.LayerNorm default eps


# ------------------------------ small helpers --------------------------------
def _round_up(x, m):
    return (x + m - 1) // m * m


@functools.lru_cache(maxsize=None)
def _vmem_limit_bytes():
    """Generation-aware scoped-VMEM budget (~75% of physical VMEM)."""
    cap = 64 * 1024 * 1024  # safe default == v7x physical VMEM
    try:
        info = pltpu.get_tpu_info()
        cap = int(getattr(info, "vmem_capacity_bytes", cap) or cap)
    except Exception:
        pass
    return (3 * cap) // 4


def _pick_row_tile(m, dp, dop, in_itemsize, out_itemsize, vmem_budget, resident_bytes):
    """Largest multiple-of-8 row tile whose pipelined I/O buffers fit VMEM."""
    # 2 input buffers + 2 output buffers per row, plus a rough f32 working set.
    per_row = 2 * dp * in_itemsize + 2 * dop * out_itemsize + 4 * (dp + dop)
    avail = vmem_budget - resident_bytes
    cap = avail // per_row if avail > per_row * 8 else 8
    cap = min(cap, 1024)
    if m >= 16:
        # Keep at least 2 grid steps so both v7x TensorCores get work on the
        # ("parallel",) row axis.
        cap = min(cap, _round_up(-(-m // 2), 8))
    cap = min(cap, _round_up(m, 8))
    return max(8, (cap // 8) * 8)


def _const_spec(shape, single_buffer):
    """BlockSpec for a grid-invariant operand (weight / bias / gamma / beta)."""
    index_map = lambda i: (0,) * len(shape)
    if single_buffer:
        # Constant index_map -> never re-DMAed; one VMEM copy instead of two.
        return pl.BlockSpec(shape, index_map, pipeline_mode=pl.Buffered(1))
    return pl.BlockSpec(shape, index_map)


def _call_pref_single_buffered(builder, args):
    """Try single-buffered constant operands; fall back to default buffering."""
    try:
        return builder(True)(*args)
    except Exception:  # pipeline_mode=pl.Buffered(1) unsupported on this jax
        return builder(False)(*args)


# ----------------------------- shared LN row math -----------------------------
def _normalized_rows(xf, true_d):
    """(x - mean) * rsqrt(var + eps) over the lane axis of a (TM, Dp) f32 tile.

    Columns >= true_d are zero padding; the masking branch is emitted only
    when padding actually exists (static decision).  Padded x columns are zero
    for real rows, so the unmasked sum already gives the true mean.
    """
    inv_d = 1.0 / float(true_d)  # multiply by constant, no divide
    mean = jnp.sum(xf, axis=-1, keepdims=True) * inv_d
    if xf.shape[-1] == true_d:
        cen = xf - mean
    else:
        col = jax.lax.broadcasted_iota(jnp.int32, xf.shape, 1)
        cen = jnp.where(col < true_d, xf - mean, 0.0)
    var = jnp.sum(cen * cen, axis=-1, keepdims=True) * inv_d  # biased (PyTorch)
    return cen * jax.lax.rsqrt(var + EPS)  # rsqrt -> EUP slot


# ------------------------ fused PreNorm(Linear) kernel ------------------------
def _prenorm_linear_kernel(x_ref, w_ref, bias_ref, o_ref, *, true_d):
    # x: (TM, Dp)   w: (Dp, Dop)  (already gamma-scaled)   bias: (1, Dop)
    y = _normalized_rows(x_ref[...].astype(jnp.float32), true_d)
    # Feed the MXU in the weight's native dtype (bf16 stays bf16); f32 accum.
    out = jnp.dot(y.astype(w_ref.dtype), w_ref[...],
                  preferred_element_type=jnp.float32)
    o_ref[...] = (out + bias_ref[...].astype(jnp.float32)).astype(o_ref.dtype)


def pre_norm_linear(x, gamma, beta, w, bias, *, mxu_dtype=None):
    """Fused PreNorm with fn = Linear:  LayerNorm(x) @ w + bias.

    mxu_dtype: optionally cast the (gamma-folded) weight for the MXU (e.g.
    jnp.bfloat16 on v5e); accumulation stays f32 via preferred_element_type.
    """
    B, N, D = x.shape
    Do = w.shape[1]
    M = B * N
    Dp = _round_up(D, 128)
    Dop = _round_up(Do, 128)

    # Fold the LayerNorm affine into the GEMM:
    #   LN(x) @ w + bias = (cen*inv) @ (gamma[:,None]*w) + (beta @ w + bias)
    w_eff = gamma[:, None].astype(w.dtype) * w
    bias_eff = beta.astype(jnp.float32) @ w.astype(jnp.float32) + bias.astype(jnp.float32)
    if mxu_dtype is not None:
        w_eff = w_eff.astype(mxu_dtype)

    x2 = x.reshape(M, D)
    if Dp != D:  # pad feature dims only when needed (no row padding ever)
        x2 = jnp.pad(x2, ((0, 0), (0, Dp - D)))
        w_eff = jnp.pad(w_eff, ((0, Dp - D), (0, 0)))
    if Dop != Do:
        w_eff = jnp.pad(w_eff, ((0, 0), (0, Dop - Do)))
        bias_eff = jnp.pad(bias_eff, ((0, Dop - Do),))
    bias2 = bias_eff.reshape(1, Dop)

    vmem_budget = _vmem_limit_bytes()
    resident = Dp * Dop * w_eff.dtype.itemsize + Dop * 4  # weight + bias (1 copy)
    tm = _pick_row_tile(M, Dp, Dop, x.dtype.itemsize, x.dtype.itemsize,
                        vmem_budget, resident)
    grid = (pl.cdiv(M, tm),)

    def builder(single_buffer_constants):
        return pl.pallas_call(
            functools.partial(_prenorm_linear_kernel, true_d=D),
            out_shape=jax.ShapeDtypeStruct((M, Dop), x.dtype),
            grid_spec=pltpu.PrefetchScalarGridSpec(
                num_scalar_prefetch=0,
                grid=grid,
                in_specs=[
                    pl.BlockSpec((tm, Dp), lambda i: (i, 0)),
                    _const_spec((Dp, Dop), single_buffer_constants),  # VMEM-resident weight
                    _const_spec((1, Dop), single_buffer_constants),
                ],
                out_specs=pl.BlockSpec((tm, Dop), lambda i: (i, 0)),
            ),
            compiler_params=pltpu.CompilerParams(
                dimension_semantics=("parallel",),
                vmem_limit_bytes=vmem_budget,
            ),
        )

    out = _call_pref_single_buffered(builder, (x2, w_eff, bias2))

    if Dop != Do:
        out = out[:, :Do]
    return out.reshape(B, N, Do)


# --------------------- standalone LayerNorm (arbitrary fn) --------------------
def _layernorm_kernel(x_ref, g_ref, b_ref, o_ref, *, true_d):
    y = _normalized_rows(x_ref[...].astype(jnp.float32), true_d)
    y = y * g_ref[...].astype(jnp.float32) + b_ref[...].astype(jnp.float32)
    o_ref[...] = y.astype(o_ref.dtype)


def layer_norm(x, gamma, beta):
    B, N, D = x.shape
    M = B * N
    Dp = _round_up(D, 128)

    x2 = x.reshape(M, D)
    g2 = gamma.reshape(1, D)
    b2 = beta.reshape(1, D)
    if Dp != D:
        x2 = jnp.pad(x2, ((0, 0), (0, Dp - D)))
        g2 = jnp.pad(g2, ((0, 0), (0, Dp - D)))
        b2 = jnp.pad(b2, ((0, 0), (0, Dp - D)))

    vmem_budget = _vmem_limit_bytes()
    resident = 2 * Dp * x.dtype.itemsize  # gamma + beta (1 copy each)
    tm = _pick_row_tile(M, Dp, Dp, x.dtype.itemsize, x.dtype.itemsize,
                        vmem_budget, resident)
    grid = (pl.cdiv(M, tm),)

    def builder(single_buffer_constants):
        return pl.pallas_call(
            functools.partial(_layernorm_kernel, true_d=D),
            out_shape=jax.ShapeDtypeStruct((M, Dp), x.dtype),
            grid_spec=pltpu.PrefetchScalarGridSpec(
                num_scalar_prefetch=0,
                grid=grid,
                in_specs=[
                    pl.BlockSpec((tm, Dp), lambda i: (i, 0)),
                    _const_spec((1, Dp), single_buffer_constants),
                    _const_spec((1, Dp), single_buffer_constants),
                ],
                out_specs=pl.BlockSpec((tm, Dp), lambda i: (i, 0)),
            ),
            compiler_params=pltpu.CompilerParams(
                dimension_semantics=("parallel",),
                vmem_limit_bytes=vmem_budget,
            ),
        )

    out = _call_pref_single_buffered(builder, (x2, g2, b2))

    if Dp != D:
        out = out[:, :D]
    return out.reshape(B, N, D)


def pre_norm(x, gamma, beta, fn):
    """Generic PreNorm.forward: fn(LayerNorm(x)) for arbitrary fn."""
    return fn(layer_norm(x, gamma, beta))


# ---------------------------------- reference ---------------------------------
def _ref_layernorm(x, gamma, beta):
    x32 = x.astype(jnp.float32)
    mean = jnp.mean(x32, axis=-1, keepdims=True)
    var = jnp.mean((x32 - mean) ** 2, axis=-1, keepdims=True)
    return ((x32 - mean) / jnp.sqrt(var + EPS)) * gamma + beta


if __name__ == "__main__":
    key = jax.random.PRNGKey(0)
    B, N, dim, fusion_factor = 2, 8, 32, 1
    D = dim * fusion_factor

    k_x, k_w, k_b, k_g, k_be = jax.random.split(key, 5)
    x = jax.random.normal(k_x, (B, N, D), dtype=jnp.float32)

    # nn.LayerNorm(dim * fusion_factor) params (non-trivial to exercise folding)
    gamma = 1.0 + 0.1 * jax.random.normal(k_g, (D,), dtype=jnp.float32)
    beta = 0.05 * jax.random.normal(k_be, (D,), dtype=jnp.float32)

    # params for the wrapped fn (a Linear D -> D)
    w = jax.random.normal(k_w, (D, D), dtype=jnp.float32) * 0.02
    b = jax.random.normal(k_b, (D,), dtype=jnp.float32) * 0.02

    # Fused path (fn == Linear): one kernel, no HBM round-trip of LN output.
    out_fused = jax.block_until_ready(pre_norm_linear(x, gamma, beta, w, b))

    # Generic path (arbitrary fn): Pallas LayerNorm kernel + plain-JAX fn.
    out_generic = jax.block_until_ready(
        pre_norm(x, gamma, beta, lambda y: y @ w + b)
    )

    ref = _ref_layernorm(x, gamma, beta) @ w + b
    assert out_fused.shape == (B, N, D)
    assert out_generic.shape == (B, N, D)
    assert jnp.allclose(out_fused, ref, atol=1e-4, rtol=1e-4), (
        float(jnp.max(jnp.abs(out_fused - ref)))
    )
    assert jnp.allclose(out_generic, ref, atol=1e-4, rtol=1e-4), (
        float(jnp.max(jnp.abs(out_generic - ref)))
    )

    print("KERNEL_OK")
</pallas_src>

<mosaic_0001>
module attributes {stable_mosaic.version = 11 : i64} {
  func.func @_prenorm_linear_kernel(%arg0: i32, %arg1: memref<8x128xf32, #tpu.memory_space<vmem>>, %arg2: memref<128x128xf32, #tpu.memory_space<vmem>>, %arg3: memref<1x128xf32, #tpu.memory_space<vmem>>, %arg4: memref<8x128xf32, #tpu.memory_space<vmem>>) attributes {dimension_semantics = [#tpu.dimension_semantics<parallel>], iteration_bounds = array<i64: 2>, scalar_prefetch = 0 : i64, scratch_operands = 0 : i64, tpu.core_type = #tpu.core_type<tc>, window_params = [{transform_indices = @transform_0, window_bounds = array<i64: 8, 128>}, {pipeline_mode = #tpu.pipeline_mode<synchronous>, transform_indices = @transform_1, window_bounds = array<i64: 128, 128>}, {pipeline_mode = #tpu.pipeline_mode<synchronous>, transform_indices = @transform_2, window_bounds = array<i64: 1, 128>}, {transform_indices = @transform_3, window_bounds = array<i64: 8, 128>}]} {
    %c0 = arith.constant 0 : index
    %c0_0 = arith.constant 0 : index
    %0 = vector.load %arg1[%c0, %c0_0] : memref<8x128xf32, #tpu.memory_space<vmem>>, vector<8x128xf32>
    %cst = arith.constant dense<0.000000e+00> : vector<8xf32>
    %1 = vector.multi_reduction <add>, %0, %cst [1] : vector<8x128xf32> to vector<8xf32>
    %2 = vector.shape_cast %1 : vector<8xf32> to vector<8x1xf32>
    %cst_1 = arith.constant 3.125000e-02 : f32
    %3 = vector.broadcast %cst_1 : f32 to vector<8x1xf32>
    %4 = arith.mulf %2, %3 : vector<8x1xf32>
    %5 = tpu.iota {dimensions = array<i32: 1>} : vector<8x128xi32>
    %c32_i32 = arith.constant 32 : i32
    %6 = vector.broadcast %c32_i32 : i32 to vector<8x128xi32>
    %7 = arith.cmpi slt, %5, %6 : vector<8x128xi32>
    %8 = vector.broadcast %4 : vector<8x1xf32> to vector<8x128xf32>
    %9 = arith.subf %0, %8 : vector<8x128xf32>
    %cst_2 = arith.constant 0.000000e+00 : f32
    %10 = vector.broadcast %cst_2 : f32 to vector<8x128xf32>
    %11 = arith.select %7, %9, %10 : vector<8x128xi1>, vector<8x128xf32>
    %12 = arith.mulf %11, %11 : vector<8x128xf32>
    %cst_3 = arith.constant dense<0.000000e+00> : vector<8xf32>
    %13 = vector.multi_reduction <add>, %12, %cst_3 [1] : vector<8x128xf32> to vector<8xf32>
    %14 = vector.shape_cast %13 : vector<8xf32> to vector<8x1xf32>
    %cst_4 = arith.constant 3.125000e-02 : f32
    %15 = vector.broadcast %cst_4 : f32 to vector<8x1xf32>
    %16 = arith.mulf %14, %15 : vector<8x1xf32>
    %cst_5 = arith.constant 9.99999974E-6 : f32
    %17 = vector.broadcast %cst_5 : f32 to vector<8x1xf32>
    %18 = arith.addf %16, %17 : vector<8x1xf32>
    %19 = math.rsqrt %18 : vector<8x1xf32>
    %20 = vector.broadcast %19 : vector<8x1xf32> to vector<8x128xf32>
    %21 = arith.mulf %11, %20 : vector<8x128xf32>
    %c0_6 = arith.constant 0 : index
    %c0_7 = arith.constant 0 : index
    %22 = vector.load %arg2[%c0_6, %c0_7] : memref<128x128xf32, #tpu.memory_space<vmem>>, vector<128x128xf32>
    %cst_8 = arith.constant dense<0.000000e+00> : vector<8x128xf32>
    %23 = tpu.matmul %21, %22, %cst_8 {dimension_numbers = #tpu.dot_dimension_numbers<[1], [0], [0], [1], [0, 0, 1, 1], [], []>} : vector<8x128xf32>, vector<128x128xf32>, vector<8x128xf32> -> vector<8x128xf32>
    %c0_9 = arith.constant 0 : index
    %c0_10 = arith.constant 0 : index
    %24 = vector.load %arg3[%c0_9, %c0_10] : memref<1x128xf32, #tpu.memory_space<vmem>>, vector<1x128xf32>
    %25 = vector.broadcast %24 : vector<1x128xf32> to vector<8x128xf32>
    %26 = arith.addf %23, %25 : vector<8x128xf32>
    %c0_11 = arith.constant 0 : index
    %c0_12 = arith.constant 0 : index
    %27 = vector.load %arg4[%c0_11, %c0_12] : memref<8x128xf32, #tpu.memory_space<vmem>>, vector<8x128xf32>
    tpu.vector_store %arg4[%c0_11, %c0_12], %26 {strides = array<i32>} : memref<8x128xf32, #tpu.memory_space<vmem>>, vector<8x128xf32>,
    return
  }
  func.func @transform_0(%arg0: i32) -> (i32, i32) {
    %c0_i32 = arith.constant 0 : i32
    %c0_i32_0 = arith.constant 0 : i32
    return %arg0, %c0_i32 : i32, i32
  }
  func.func @transform_1(%arg0: i32) -> (i32, i32) {
    %c0_i32 = arith.constant 0 : i32
    %c0_i32_0 = arith.constant 0 : i32
    %c0_i32_1 = arith.constant 0 : i32
    return %c0_i32, %c0_i32_0 : i32, i32
  }
  func.func @transform_2(%arg0: i32) -> (i32, i32) {
    %c0_i32 = arith.constant 0 : i32
    %c0_i32_0 = arith.constant 0 : i32
    %c0_i32_1 = arith.constant 0 : i32
    return %c0_i32, %c0_i32_0 : i32, i32
  }
  func.func @transform_3(%arg0: i32) -> (i32, i32) {
    %c0_i32 = arith.constant 0 : i32
    %c0_i32_0 = arith.constant 0 : i32
    return %arg0, %c0_i32 : i32, i32
  }
}

module attributes {stable_mosaic.version = 11 : i64} {
  func.func @_prenorm_linear_kernel(%arg0: i32, %arg1: memref<8x128xf32, #tpu.memory_space<vmem>>, %arg2: memref<128x128xf32, #tpu.memory_space<vmem>>, %arg3: memref<1x128xf32, #tpu.memory_space<vmem>>, %arg4: memref<8x128xf32, #tpu.memory_space<vmem>>) attributes {dimension_semantics = [#tpu.dimension_semantics<parallel>], iteration_bounds = array<i64: 2>, scalar_prefetch = 0 : i64, scratch_operands = 0 : i64, tpu.core_type = #tpu.core_type<tc>, window_params = [{transform_indices = @transform_0, window_bounds = array<i64: 8, 128>}, {pipeline_mode = #tpu.pipeline_mode<synchronous>, transform_indices = @transform_1, window_bounds = array<i64: 128, 128>}, {pipeline_mode = #tpu.pipeline_mode<synchronous>, transform_indices = @transform_2, window_bounds = array<i64: 1, 128>}, {transform_indices = @transform_3, window_bounds = array<i64: 8, 128>}]} {
    %c0 = arith.constant 0 : index
    %c0_0 = arith.constant 0 : index
    %0 = vector.load %arg1[%c0, %c0_0] : memref<8x128xf32, #tpu.memory_space<vmem>>, vector<8x128xf32>
    %cst = arith.constant dense<0.000000e+00> : vector<8xf32>
    %1 = vector.multi_reduction <add>, %0, %cst [1] : vector<8x128xf32> to vector<8xf32>
    %2 = vector.shape_cast %1 : vector<8xf32> to vector<8x1xf32>
    %cst_1 = arith.constant 3.125000e-02 : f32
    %3 = vector.broadcast %cst_1 : f32 to vector<8x1xf32>
    %4 = arith.mulf %2, %3 : vector<8x1xf32>
    %5 = tpu.iota {dimensions = array<i32: 1>} : vector<8x128xi32>
    %c32_i32 = arith.constant 32 : i32
    %6 = vector.broadcast %c32_i32 : i32 to vector<8x128xi32>
    %7 = arith.cmpi slt, %5, %6 : vector<8x128xi32>
    %8 = vector.broadcast %4 : vector<8x1xf32> to vector<8x128xf32>
    %9 = arith.subf %0, %8 : vector<8x128xf32>
    %cst_2 = arith.constant 0.000000e+00 : f32
    %10 = vector.broadcast %cst_2 : f32 to vector<8x128xf32>
    %11 = arith.select %7, %9, %10 : vector<8x128xi1>, vector<8x128xf32>
    %12 = arith.mulf %11, %11 : vector<8x128xf32>
    %cst_3 = arith.constant dense<0.000000e+00> : vector<8xf32>
    %13 = vector.multi_reduction <add>, %12, %cst_3 [1] : vector<8x128xf32> to vector<8xf32>
    %14 = vector.shape_cast %13 : vector<8xf32> to vector<8x1xf32>
    %cst_4 = arith.constant 3.125000e-02 : f32
    %15 = vector.broadcast %cst_4 : f32 to vector<8x1xf32>
    %16 = arith.mulf %14, %15 : vector<8x1xf32>
    %cst_5 = arith.constant 9.99999974E-6 : f32
    %17 = vector.broadcast %cst_5 : f32 to vector<8x1xf32>
    %18 = arith.addf %16, %17 : vector<8x1xf32>
    %19 = math.rsqrt %18 : vector<8x1xf32>
    %20 = vector.broadcast %19 : vector<8x1xf32> to vector<8x128xf32>
    %21 = arith.mulf %11, %20 : vector<8x128xf32>
    %c0_6 = arith.constant 0 : index
    %c0_7 = arith.constant 0 : index
    %22 = vector.load %arg2[%c0_6, %c0_7] : memref<128x128xf32, #tpu.memory_space<vmem>>, vector<128x128xf32>
    %cst_8 = arith.constant dense<0.000000e+00> : vector<8x128xf32>
    %23 = tpu.matmul %21, %22, %cst_8 {dimension_numbers = #tpu.dot_dimension_numbers<[1], [0], [0], [1], [0, 0, 1, 1], [], []>} : vector<8x128xf32>, vector<128x128xf32>, vector<8x128xf32> -> vector<8x128xf32>
    %c0_9 = arith.constant 0 : index
    %c0_10 = arith.constant 0 : index
    %24 = vector.load %arg3[%c0_9, %c0_10] : memref<1x128xf32, #tpu.memory_space<vmem>>, vector<1x128xf32>
    %25 = vector.broadcast %24 : vector<1x128xf32> to vector<8x128xf32>
    %26 = arith.addf %23, %25 : vector<8x128xf32>
    %c0_11 = arith.constant 0 : index
    %c0_12 = arith.constant 0 : index
    %27 = vector.load %arg4[%c0_11, %c0_12] : memref<8x128xf32, #tpu.memory_space<vmem>>, vector<8x128xf32>
    tpu.vector_store %arg4[%c0_11, %c0_12], %26 {strides = array<i32>} : memref<8x128xf32, #tpu.memory_space<vmem>>, vector<8x128xf32>,
    return
  }
  func.func @transform_0(%arg0: i32) -> (i32, i32) {
    %c0_i32 = arith.constant 0 : i32
    %c0_i32_0 = arith.constant 0 : i32
    return %arg0, %c0_i32 : i32, i32
  }
  func.func @transform_1(%arg0: i32) -> (i32, i32) {
    %c0_i32 = arith.constant 0 : i32
    %c0_i32_0 = arith.constant 0 : i32
    %c0_i32_1 = arith.constant 0 : i32
    return %c0_i32, %c0_i32_0 : i32, i32
  }
  func.func @transform_2(%arg0: i32) -> (i32, i32) {
    %c0_i32 = arith.constant 0 : i32
    %c0_i32_0 = arith.constant 0 : i32
    %c0_i32_1 = arith.constant 0 : i32
    return %c0_i32, %c0_i32_0 : i32, i32
  }
  func.func @transform_3(%arg0: i32) -> (i32, i32) {
    %c0_i32 = arith.constant 0 : i32
    %c0_i32_0 = arith.constant 0 : i32
    return %arg0, %c0_i32 : i32, i32
  }
}

</mosaic_0001>

<llo_original>
// kernel: tpu_custom_call.1
$region0: #{tpu_custom_call.1}
  #allocation0 [shape = 'u32[]', space=smem, size = 0x4, offset = 0x4, fixed_abs, tag = 'smem constant byte address 0x4 - core index']
  #allocation1 [shape = 'u32[72,128]{1,0:T(1,128)}', space=vmem, size = 0x9000, scoped, tag = 'internal scratch']
  %s0 = inlined_call_operand.hbm [shape: f32[16,128], index: 0, kind: input, shape index: {}]
  %s1 = inlined_call_operand.hbm [shape: f32[128,128], index: 1, kind: input, shape index: {}]
  %s2 = inlined_call_operand.vmem [shape: f32[1,128], index: 2, kind: input, shape index: {}]
  %s3 = inlined_call_operand.hbm [shape: f32[16,128], index: 3, kind: output, shape index: {}]
  %s4 = sld [smem:[#allocation0]]
  $region53: #{tpu_custom_call.1} parent=0
    _
  %s6 = ssub.s32 1, %s4
  %s7 = scalar_select 0, %s6, %s4
  $region1: #{tpu_custom_call.1} parent=0
    #allocation2 [shape = 'u8[8192]{0}', space=vmem, size = 0x2000, scoped, tag = 'input window, operand 0']
    #allocation3 [shape = 's32[2]{0}', space=sflag, size = 0x8, scoped, tag = 'scoped memory for tpu_custom_call.1']
    #allocation4 [shape = 's32[2]{0}', space=sflag, size = 0x8, scoped, tag = 'scoped memory for tpu_custom_call.1']
    #allocation5 [shape = 'u8[65536]{0}', space=vmem, size = 0x10000, scoped, tag = 'input window, operand 1, single buffered']
    #allocation6 [shape = 's32[1]{0}', space=sflag, size = 0x4, scoped, tag = 'scoped memory for tpu_custom_call.1']
    #allocation7 [shape = 'u8[8192]{0}', space=vmem, size = 0x2000, scoped, tag = 'output window, operand 0']
    %8 = vsyncpa [#allocation3], 0
    %s9 = scalar_lea.sflag [#allocation3], 1
    %10 = vsyncpa %s9, 0
    %11 = vsyncpa [#allocation6], 0
    %12 = vsyncpa [#allocation4], 0
    %s13 = scalar_lea.sflag [#allocation4], 1
    %14 = vsyncpa %s13, 0
    loop: start=0, step=1, limit=4
    $region2: #{tpu_custom_call.1} parent=1 // loop_pre_header
      _
    $region3: #{tpu_custom_call.1} parent=1 // loop_header
      %s16 = sphi 0, %s20
      %p17 = scmp.ge.s32.totalorder %s16, 4
      %s26 = sphi 0, %s28
      %s29 = sphi 0, %s26
      %s30 = sphi 0, %s29
      %s46 = sphi 0, %s30
      %s50 = sphi 0, %s50
      %s52 = sphi 0, %s50
      %s53 = sphi 0, %s52
      %s67 = sphi 0, %s53
      %s71 = sphi 0, %s71
      %s73 = sphi 0, %s71
      %s74 = sphi 0, %s73
      %s88 = sphi 0, %s74
      %s94 = sphi 0, %s96
      %s97 = sphi 0, %s94
      %s98 = sphi 0, %s97
      %s114 = sphi 0, %s98
    $region4: #{tpu_custom_call.1} parent=1 // loop_header_branch
      %19 = sbr.rel (%p17) target = $region8
    $region5: #{tpu_custom_call.1} parent=1 // loop_body
      %s21 = ssub.s32 %s16, 1
      %s22 = ssub.s32 %s16, 2
      %s23 = sadd.s32 %s16, 1
      %s24 = ssub.s32 %s16, %s23
      %p25 = scmp.eq.s32.totalorder %s24, 0
      %s27 = sadd.s32 %s26, 1
      %s28 = scalar_select %p25, %s26, %s27
      %p31 = pneg %p25
      %p32 = scmp.eq.s32.totalorder %s16, 1
      %p33 = por %p31, %p32
      %p34 = scmp.ne.s32.totalorder %s26, %s29
      %p35 = scmp.eq.s32.totalorder %s16, 0
      %p36 = por %p34, %p35
      %p37 = scmp.ne.s32.totalorder %s26, %s29
      %p38 = scmp.eq.s32.totalorder %s21, 1
      %p39 = por %p37, %p38
      %p40 = scmp.ne.s32.totalorder %s29, %s30
      %p41 = scmp.eq.s32.totalorder %s21, 0
      %p42 = por %p40, %p41
      %p43 = scmp.ne.s32.totalorder %s29, %s30
      %p44 = scmp.eq.s32.totalorder %s22, 1
      %p45 = por %p43, %p44
      %p47 = scmp.ne.s32.totalorder %s30, %s46
      %p48 = scmp.eq.s32.totalorder %s22, 0
      %p49 = por %p47, %p48
      %s51 = sadd.s32 %s50, 1
      %p54 = scmp.eq.s32.totalorder %s16, 1
      %p55 = scmp.ne.s32.totalorder %s50, %s52
      %p56 = scmp.eq.s32.totalorder %s16, 0
      %p57 = por %p55, %p56
      %p58 = scmp.ne.s32.totalorder %s50, %s52
      %p59 = scmp.eq.s32.totalorder %s21, 1
      %p60 = por %p58, %p59
      %p61 = scmp.ne.s32.totalorder %s52, %s53
      %p62 = scmp.eq.s32.totalorder %s21, 0
      %p63 = por %p61, %p62
      %p64 = scmp.ne.s32.totalorder %s52, %s53
      %p65 = scmp.eq.s32.totalorder %s22, 1
      %p66 = por %p64, %p65
      %p68 = scmp.ne.s32.totalorder %s53, %s67
      %p69 = scmp.eq.s32.totalorder %s22, 0
      %p70 = por %p68, %p69
      %s72 = sadd.s32 %s71, 1
      %p75 = scmp.eq.s32.totalorder %s16, 1
      %p76 = scmp.ne.s32.totalorder %s71, %s73
      %p77 = scmp.eq.s32.totalorder %s16, 0
      %p78 = por %p76, %p77
      %p79 = scmp.ne.s32.totalorder %s71, %s73
      %p80 = scmp.eq.s32.totalorder %s21, 1
      %p81 = por %p79, %p80
      %p82 = scmp.ne.s32.totalorder %s73, %s74
      %p83 = scmp.eq.s32.totalorder %s21, 0
      %p84 = por %p82, %p83
      %p85 = scmp.ne.s32.totalorder %s73, %s74
      %p86 = scmp.eq.s32.totalorder %s22, 1
      %p87 = por %p85, %p86
      %p89 = scmp.ne.s32.totalorder %s74, %s88
      %p90 = scmp.eq.s32.totalorder %s22, 0
      %p91 = por %p89, %p90
      %s92 = ssub.s32 %s16, %s23
      %p93 = scmp.eq.s32.totalorder %s92, 0
      %s95 = sadd.s32 %s94, 1
      %s96 = scalar_select %p93, %s94, %s95
      %p99 = pneg %p93
      %p100 = scmp.eq.s32.totalorder %s16, 1
      %p101 = por %p99, %p100
      %p102 = scmp.ne.s32.totalorder %s94, %s97
      %p103 = scmp.eq.s32.totalorder %s16, 0
      %p104 = por %p102, %p103
      %p105 = scmp.ne.s32.totalorder %s94, %s97
      %p106 = scmp.eq.s32.totalorder %s21, 1
      %p107 = por %p105, %p106
      %p108 = scmp.ne.s32.totalorder %s97, %s98
      %p109 = scmp.eq.s32.totalorder %s21, 0
      %p110 = por %p108, %p109
      %p111 = scmp.ne.s32.totalorder %s97, %s98
      %p112 = scmp.eq.s32.totalorder %s22, 1
      %p113 = por %p111, %p112
      %p115 = scmp.ne.s32.totalorder %s98, %s114
      %p116 = scmp.eq.s32.totalorder %s22, 0
      %p117 = por %p115, %p116
      %p118 = scmp.le.s32.totalorder 1, %s16
      %p119 = scmp.lt.s32.totalorder %s16, 3
      %p120 = pnand %p118, %p119
      %p121 = pneg %p120
      // Predicated region
      $region9: #{tpu_custom_call.1} parent=5 // pred_check
        _
      $region10: #{tpu_custom_call.1} parent=5 // pred_check_branch
        %123 = sbr.rel (%p120) target = $region12
      $region11: #{tpu_custom_call.1} parent=5 // pred_region
        %s124 = ssub.s32 %s16, 1
        // Predicated region
        $region13: #{tpu_custom_call.1} parent=11 // pred_check
          %p125 = pneg %p63
        $region14: #{tpu_custom_call.1} parent=11 // pred_check_branch
          %127 = sbr.rel (%p125) target = $region16
        $region15: #{tpu_custom_call.1} parent=11 // pred_region
          %129 = vsyncadd [#allocation6], 0
          %s130 = sshll.u32 %s1, 4
          %s131 = int_to_ptr.hbm [resolvable:$true] %s130
          %s132 = sshll.u32 [#allocation5], 4
          %s133 = int_to_ptr.vmem [resolvable:$true] %s132
          %138 = dma.hbm_to_vmem [thread:$0]  %s131, 2048, %s133, [#allocation6], 128, 128, 8
        $region16: #{tpu_custom_call.1} parent=11 // pred_fallthru
          _
        // Predicated region
        $region17: #{tpu_custom_call.1} parent=11 // pred_check
          %p139 = pneg %p84
        $region18: #{tpu_custom_call.1} parent=11 // pred_check_branch
          %141 = sbr.rel (%p139) target = $region20
        $region19: #{tpu_custom_call.1} parent=11 // pred_region
          _
        $region20: #{tpu_custom_call.1} parent=11 // pred_fallthru
          _
      $region12: #{tpu_custom_call.1} parent=5 // pred_fallthru
        _
      %p142 = scmp.lt.s32.totalorder %s16, 2
      // Predicated region
      $region21: #{tpu_custom_call.1} parent=5 // pred_check
        %p143 = pneg %p142
      $region22: #{tpu_custom_call.1} parent=5 // pred_check_branch
        %145 = sbr.rel (%p143) target = $region24
      $region23: #{tpu_custom_call.1} parent=5 // pred_region
        // Predicated region
        $region25: #{tpu_custom_call.1} parent=23 // pred_check
          %p146 = pneg %p36
        $region26: #{tpu_custom_call.1} parent=23 // pred_check_branch
          %148 = sbr.rel (%p146) target = $region28
        $region27: #{tpu_custom_call.1} parent=23 // pred_region
          %s149 = sand.u32 %s26, 1
          %s150 = scalar_lea.sflag [#allocation3], %s149
          %s151 = sand.u32 %s26, 1
          %s152 = smul.addr %s151, 8
          %s153 = scalar_lea.vmem [#allocation2], %s152
          %155 = vsyncadd %s150, 0
          %s156 = smul.addr %s16, 8
          %s157 = scalar_lea.hbm %s0, %s156
          %s159 = sshll.u32 %s157, 4
          %s160 = int_to_ptr.hbm [resolvable:$true] %s159
          %s161 = sshll.u32 %s153, 4
          %s162 = int_to_ptr.vmem [resolvable:$true] %s161
          %164 = dma.hbm_to_vmem [thread:$0]  %s160, 128, %s162, %s150
        $region28: #{tpu_custom_call.1} parent=23 // pred_fallthru
          _
      $region24: #{tpu_custom_call.1} parent=5 // pred_fallthru
        _
      %p165 = scmp.le.s32.totalorder 1, %s16
      %p166 = scmp.lt.s32.totalorder %s16, 3
      %p167 = pnand %p165, %p166
      %p168 = pneg %p167
      // Predicated region
      $region29: #{tpu_custom_call.1} parent=5 // pred_check
        _
      $region30: #{tpu_custom_call.1} parent=5 // pred_check_branch
        %170 = sbr.rel (%p167) target = $region32
      $region31: #{tpu_custom_call.1} parent=5 // pred_region
        %s171 = ssub.s32 %s16, 1
        %s172 = sand.u32 %s29, 1
        %s173 = scalar_lea.sflag [#allocation3], %s172
        %s174 = sand.u32 %s29, 1
        %s175 = smul.addr %s174, 8
        %s176 = scalar_lea.vmem [#allocation2], %s175
        // Predicated region
        $region33: #{tpu_custom_call.1} parent=31 // pred_check
          %p177 = pneg %p42
        $region34: #{tpu_custom_call.1} parent=31 // pred_check_branch
          %179 = sbr.rel (%p177) target = $region36
        $region35: #{tpu_custom_call.1} parent=31 // pred_region
          %181 = dma.done %s173, 128
        $region36: #{tpu_custom_call.1} parent=31 // pred_fallthru
          _
        // Predicated region
        $region37: #{tpu_custom_call.1} parent=31 // pred_check
          %p182 = pneg %p63
        $region38: #{tpu_custom_call.1} parent=31 // pred_check_branch
          %184 = sbr.rel (%p182) target = $region40
        $region39: #{tpu_custom_call.1} parent=31 // pred_region
          %186 = dma.done [#allocation6], 2048
        $region40: #{tpu_custom_call.1} parent=31 // pred_fallthru
          _
        %s187 = sand.u32 %s29, 1
        %s188 = scalar_lea.sflag [#allocation3], %s187
        %s189 = sand.u32 %s29, 1
        %s190 = smul.addr %s189, 8
        %s191 = scalar_lea.vmem [#allocation2], %s190
        %p192 = pneg %p42
        %p193 = pneg %p39
        %p194 = pneg %p63
        %p195 = pneg %p60
        %p196 = pneg %p84
        %p197 = pneg %p81
        %p198 = pneg %p110
        %p199 = pneg %p107
        %s200 = sand.u32 %s97, 1
        %s201 = scalar_lea.sflag [#allocation4], %s200
        %s202 = sand.u32 %s97, 1
        %s203 = smul.addr %s202, 8
        %s204 = scalar_lea.vmem [#allocation7], %s203
        %v205 = vld [vmem:[%s176] sm:$0xff]
        %206 = vadd.xlane.f32.xlu0 %v205
        %v207 = vpop.xlane.xlu0 %206
        %v208 = vmul.f32 %v207, 0.03125
        %v209 = vlaneseq
        %v210 = vand.u32 %v209, 127
        %vm211 = vcmp.lt.s32.totalorder %v210, 32
        %v212 = vsub.f32 %v205, %v208
        %v213 = vsel %vm211, %v212, 0.0
        %v214 = vmul.f32 %v213, %v213
        %215 = vadd.xlane.f32.xlu0 %v214
        %v216 = vpop.xlane.xlu0 %215
        %v217 = vmul.f32 %v216, 0.03125
        %v218 = vadd.f32 %v217, 1e-05
        %v219 = vrsqrt.pop %v218
        %v220 = vmul.f32 %v219, %v218
        %v221 = vmul.f32 %v220, %v219
        %v222 = vmul.f32 0.5, %v221
        %v223 = vsub.f32 1.5, %v222
        %v224 = vmul.f32 %v219, %v223
        %vm225 = vweird.f32 %v218
        %vm226 = vweird.f32 %v219
        %vm227 = vmor %vm225, %vm226
        %v228 = vsel %vm227, %v219, %v224
        %v229 = vmul.f32 %v213, %v228
        %v230 = vld [vmem:[#allocation5] sm:$0xff]
        %v231 = vld [vmem:[#allocation5 + $0x8] sm:$0xff]
        %v232 = vld [vmem:[#allocation5 + $0x10] sm:$0xff]
        %v233 = vld [vmem:[#allocation5 + $0x18] sm:$0xff]
        %v234 = vld [vmem:[#allocation5 + $0x20] sm:$0xff]
        %v235 = vld [vmem:[#allocation5 + $0x28] sm:$0xff]
        %v236 = vld [vmem:[#allocation5 + $0x30] sm:$0xff]
        %v237 = vld [vmem:[#allocation5 + $0x38] sm:$0xff]
        %v238 = vld [vmem:[#allocation5 + $0x40] sm:$0xff]
        %v239 = vld [vmem:[#allocation5 + $0x48] sm:$0xff]
        %v240 = vld [vmem:[#allocation5 + $0x50] sm:$0xff]
        %v241 = vld [vmem:[#allocation5 + $0x58] sm:$0xff]
        %v242 = vld [vmem:[#allocation5 + $0x60] sm:$0xff]
        %v243 = vld [vmem:[#allocation5 + $0x68] sm:$0xff]
        %v244 = vld [vmem:[#allocation5 + $0x70] sm:$0xff]
        %v245 = vld [vmem:[#allocation5 + $0x78] sm:$0xff]
        %v246 = vld [vmem:[%s2] sm:$0x1]
        %v248 = vperm.slane %v246, 0
        %250 = vmatpush.msra.mxu0 %v245
        %251 = vmatpush.msra.mxu0 %v244
        %252 = vmatpush.msra.mxu0 %v243
        %253 = vmatpush.msra.mxu0 %v242
        %254 = vmatpush.msra.mxu0 %v241
        %255 = vmatpush.msra.mxu0 %v240
        %256 = vmatpush.msra.mxu0 %v239
        %257 = vmatpush.msra.mxu0 %v238
        %258 = vmatpush.msra.mxu0 %v237
        %259 = vmatpush.msra.mxu0 %v236
        %260 = vmatpush.msra.mxu0 %v235
        %261 = vmatpush.msra.mxu0 %v234
        %262 = vmatpush.msra.mxu0 %v233
        %263 = vmatpush.msra.mxu0 %v232
        %264 = vmatpush.msra.mxu0 %v231
        %265 = vmatpush.msra.mxu0 %v230
        %266 = vmatmul.f32.gmra.mxu0 %v229
        %v267 = vpop.f32.mrf.mxu0
        %v268 = vadd.f32 %v248, %v267
        %269 = vdwg.mxu0
        %270 = vst [vmem:[%s204] sm:$0xff] %v268
        %s271 = sand.u32 %s97, 1
        %s272 = scalar_lea.sflag [#allocation4], %s271
        %s273 = sand.u32 %s97, 1
        %s274 = smul.addr %s273, 8
        %s275 = scalar_lea.vmem [#allocation7], %s274
        // Predicated region
        $region41: #{tpu_custom_call.1} parent=31 // pred_check
          %p276 = pneg %p107
        $region42: #{tpu_custom_call.1} parent=31 // pred_check_branch
          %278 = sbr.rel (%p276) target = $region44
        $region43: #{tpu_custom_call.1} parent=31 // pred_region
          %280 = vsyncadd %s272, 0
          %s281 = smul.addr %s21, 8
          %s282 = scalar_lea.hbm %s3, %s281
          %s284 = sshll.u32 %s275, 4
          %s285 = int_to_ptr.vmem [resolvable:$true] %s284
          %s286 = sshll.u32 %s282, 4
          %s287 = int_to_ptr.hbm [resolvable:$true] %s286
          %289 = dma.vmem_to_hbm [thread:$0]  %s285, 128, %s287, %s272
        $region44: #{tpu_custom_call.1} parent=31 // pred_fallthru
          _
      $region32: #{tpu_custom_call.1} parent=5 // pred_fallthru
        _
      %p290 = scmp.le.s32.totalorder 2, %s16
      // Predicated region
      $region45: #{tpu_custom_call.1} parent=5 // pred_check
        %p291 = pneg %p290
      $region46: #{tpu_custom_call.1} parent=5 // pred_check_branch
        %293 = sbr.rel (%p291) target = $region48
      $region47: #{tpu_custom_call.1} parent=5 // pred_region
        %s294 = ssub.s32 %s16, 2
        // Predicated region
        $region49: #{tpu_custom_call.1} parent=47 // pred_check
          %p295 = pneg %p113
        $region50: #{tpu_custom_call.1} parent=47 // pred_check_branch
          %297 = sbr.rel (%p295) target = $region52
        $region51: #{tpu_custom_call.1} parent=47 // pred_region
          %s298 = sand.u32 %s98, 1
          %s299 = scalar_lea.sflag [#allocation4], %s298
          %s300 = sand.u32 %s98, 1
          %s301 = smul.addr %s300, 8
          %s302 = scalar_lea.vmem [#allocation7], %s301
          %304 = dma.done %s299, 128
        $region52: #{tpu_custom_call.1} parent=47 // pred_fallthru
          _
      $region48: #{tpu_custom_call.1} parent=5 // pred_fallthru
        _
    $region6: #{tpu_custom_call.1} parent=1 // loop_footer
      %s20 = sadd.s32 1, %s16
    $region7: #{tpu_custom_call.1} parent=1 // loop_footer_branch
      %15 = sbr.rel target = $region3
    $region8: #{tpu_custom_call.1} parent=1 // loop_exit
      _
    %305 = vsyncpa [#allocation3], 1
    %s306 = scalar_lea.sflag [#allocation3], 1
    %307 = vsyncpa %s306, 1
    %308 = vsyncpa [#allocation6], 1
    %309 = vsyncpa [#allocation4], 1
    %s310 = scalar_lea.sflag [#allocation4], 1
    %311 = vsyncpa %s310, 1

// kernel: tpu_custom_call.1
$region0: #{tpu_custom_call.1}
  #allocation0 [shape = 'u32[]', space=smem, size = 0x4, offset = 0x4, fixed_abs, tag = 'smem constant byte address 0x4 - core index']
  #allocation1 [shape = 'u32[72,128]{1,0:T(1,128)}', space=vmem, size = 0x9000, scoped, tag = 'internal scratch']
  %s0 = inlined_call_operand.hbm [shape: f32[16,128], index: 0, kind: input, shape index: {}]
  %s1 = inlined_call_operand.hbm [shape: f32[128,128], index: 1, kind: input, shape index: {}]
  %s2 = inlined_call_operand.vmem [shape: f32[1,128], index: 2, kind: input, shape index: {}]
  %s3 = inlined_call_operand.hbm [shape: f32[16,128], index: 3, kind: output, shape index: {}]
  %s4 = sld [smem:[#allocation0]]
  $region53: #{tpu_custom_call.1} parent=0
    _
  %s6 = ssub.s32 1, %s4
  %s7 = scalar_select 0, %s6, %s4
  $region1: #{tpu_custom_call.1} parent=0
    #allocation2 [shape = 'u8[8192]{0}', space=vmem, size = 0x2000, scoped, tag = 'input window, operand 0']
    #allocation3 [shape = 's32[2]{0}', space=sflag, size = 0x8, scoped, tag = 'scoped memory for tpu_custom_call.1']
    #allocation4 [shape = 's32[2]{0}', space=sflag, size = 0x8, scoped, tag = 'scoped memory for tpu_custom_call.1']
    #allocation5 [shape = 'u8[65536]{0}', space=vmem, size = 0x10000, scoped, tag = 'input window, operand 1, single buffered']
    #allocation6 [shape = 's32[1]{0}', space=sflag, size = 0x4, scoped, tag = 'scoped memory for tpu_custom_call.1']
    #allocation7 [shape = 'u8[8192]{0}', space=vmem, size = 0x2000, scoped, tag = 'output window, operand 0']
    %8 = vsyncpa [#allocation3], 0
    %s9 = scalar_lea.sflag [#allocation3], 1
    %10 = vsyncpa %s9, 0
    %11 = vsyncpa [#allocation6], 0
    %12 = vsyncpa [#allocation4], 0
    %s13 = scalar_lea.sflag [#allocation4], 1
    %14 = vsyncpa %s13, 0
    loop: start=0, step=1, limit=4
    $region2: #{tpu_custom_call.1} parent=1 // loop_pre_header
      _
    $region3: #{tpu_custom_call.1} parent=1 // loop_header
      %s16 = sphi 0, %s20
      %p17 = scmp.ge.s32.totalorder %s16, 4
      %s26 = sphi 0, %s28
      %s29 = sphi 0, %s26
      %s30 = sphi 0, %s29
      %s46 = sphi 0, %s30
      %s50 = sphi 0, %s50
      %s52 = sphi 0, %s50
      %s53 = sphi 0, %s52
      %s67 = sphi 0, %s53
      %s71 = sphi 0, %s71
      %s73 = sphi 0, %s71
      %s74 = sphi 0, %s73
      %s88 = sphi 0, %s74
      %s94 = sphi 0, %s96
      %s97 = sphi 0, %s94
      %s98 = sphi 0, %s97
      %s114 = sphi 0, %s98
    $region4: #{tpu_custom_call.1} parent=1 // loop_header_branch
      %19 = sbr.rel (%p17) target = $region8
    $region5: #{tpu_custom_call.1} parent=1 // loop_body
      %s21 = ssub.s32 %s16, 1
      %s22 = ssub.s32 %s16, 2
      %s23 = sadd.s32 %s16, 1
      %s24 = ssub.s32 %s16, %s23
      %p25 = scmp.eq.s32.totalorder %s24, 0
      %s27 = sadd.s32 %s26, 1
      %s28 = scalar_select %p25, %s26, %s27
      %p31 = pneg %p25
      %p32 = scmp.eq.s32.totalorder %s16, 1
      %p33 = por %p31, %p32
      %p34 = scmp.ne.s32.totalorder %s26, %s29
      %p35 = scmp.eq.s32.totalorder %s16, 0
      %p36 = por %p34, %p35
      %p37 = scmp.ne.s32.totalorder %s26, %s29
      %p38 = scmp.eq.s32.totalorder %s21, 1
      %p39 = por %p37, %p38
      %p40 = scmp.ne.s32.totalorder %s29, %s30
      %p41 = scmp.eq.s32.totalorder %s21, 0
      %p42 = por %p40, %p41
      %p43 = scmp.ne.s32.totalorder %s29, %s30
      %p44 = scmp.eq.s32.totalorder %s22, 1
      %p45 = por %p43, %p44
      %p47 = scmp.ne.s32.totalorder %s30, %s46
      %p48 = scmp.eq.s32.totalorder %s22, 0
      %p49 = por %p47, %p48
      %s51 = sadd.s32 %s50, 1
      %p54 = scmp.eq.s32.totalorder %s16, 1
      %p55 = scmp.ne.s32.totalorder %s50, %s52
      %p56 = scmp.eq.s32.totalorder %s16, 0
      %p57 = por %p55, %p56
      %p58 = scmp.ne.s32.totalorder %s50, %s52
      %p59 = scmp.eq.s32.totalorder %s21, 1
      %p60 = por %p58, %p59
      %p61 = scmp.ne.s32.totalorder %s52, %s53
      %p62 = scmp.eq.s32.totalorder %s21, 0
      %p63 = por %p61, %p62
      %p64 = scmp.ne.s32.totalorder %s52, %s53
      %p65 = scmp.eq.s32.totalorder %s22, 1
      %p66 = por %p64, %p65
      %p68 = scmp.ne.s32.totalorder %s53, %s67
      %p69 = scmp.eq.s32.totalorder %s22, 0
      %p70 = por %p68, %p69
      %s72 = sadd.s32 %s71, 1
      %p75 = scmp.eq.s32.totalorder %s16, 1
      %p76 = scmp.ne.s32.totalorder %s71, %s73
      %p77 = scmp.eq.s32.totalorder %s16, 0
      %p78 = por %p76, %p77
      %p79 = scmp.ne.s32.totalorder %s71, %s73
      %p80 = scmp.eq.s32.totalorder %s21, 1
      %p81 = por %p79, %p80
      %p82 = scmp.ne.s32.totalorder %s73, %s74
      %p83 = scmp.eq.s32.totalorder %s21, 0
      %p84 = por %p82, %p83
      %p85 = scmp.ne.s32.totalorder %s73, %s74
      %p86 = scmp.eq.s32.totalorder %s22, 1
      %p87 = por %p85, %p86
      %p89 = scmp.ne.s32.totalorder %s74, %s88
      %p90 = scmp.eq.s32.totalorder %s22, 0
      %p91 = por %p89, %p90
      %s92 = ssub.s32 %s16, %s23
      %p93 = scmp.eq.s32.totalorder %s92, 0
      %s95 = sadd.s32 %s94, 1
      %s96 = scalar_select %p93, %s94, %s95
      %p99 = pneg %p93
      %p100 = scmp.eq.s32.totalorder %s16, 1
      %p101 = por %p99, %p100
      %p102 = scmp.ne.s32.totalorder %s94, %s97
      %p103 = scmp.eq.s32.totalorder %s16, 0
      %p104 = por %p102, %p103
      %p105 = scmp.ne.s32.totalorder %s94, %s97
      %p106 = scmp.eq.s32.totalorder %s21, 1
      %p107 = por %p105, %p106
      %p108 = scmp.ne.s32.totalorder %s97, %s98
      %p109 = scmp.eq.s32.totalorder %s21, 0
      %p110 = por %p108, %p109
      %p111 = scmp.ne.s32.totalorder %s97, %s98
      %p112 = scmp.eq.s32.totalorder %s22, 1
      %p113 = por %p111, %p112
      %p115 = scmp.ne.s32.totalorder %s98, %s114
      %p116 = scmp.eq.s32.totalorder %s22, 0
      %p117 = por %p115, %p116
      %p118 = scmp.le.s32.totalorder 1, %s16
      %p119 = scmp.lt.s32.totalorder %s16, 3
      %p120 = pnand %p118, %p119
      %p121 = pneg %p120
      // Predicated region
      $region9: #{tpu_custom_call.1} parent=5 // pred_check
        _
      $region10: #{tpu_custom_call.1} parent=5 // pred_check_branch
        %123 = sbr.rel (%p120) target = $region12
      $region11: #{tpu_custom_call.1} parent=5 // pred_region
        %s124 = ssub.s32 %s16, 1
        // Predicated region
        $region13: #{tpu_custom_call.1} parent=11 // pred_check
          %p125 = pneg %p63
        $region14: #{tpu_custom_call.1} parent=11 // pred_check_branch
          %127 = sbr.rel (%p125) target = $region16
        $region15: #{tpu_custom_call.1} parent=11 // pred_region
          %129 = vsyncadd [#allocation6], 0
          %s130 = sshll.u32 %s1, 4
          %s131 = int_to_ptr.hbm [resolvable:$true] %s130
          %s132 = sshll.u32 [#allocation5], 4
          %s133 = int_to_ptr.vmem [resolvable:$true] %s132
          %138 = dma.hbm_to_vmem [thread:$0]  %s131, 2048, %s133, [#allocation6], 128, 128, 8
        $region16: #{tpu_custom_call.1} parent=11 // pred_fallthru
          _
        // Predicated region
        $region17: #{tpu_custom_call.1} parent=11 // pred_check
          %p139 = pneg %p84
        $region18: #{tpu_custom_call.1} parent=11 // pred_check_branch
          %141 = sbr.rel (%p139) target = $region20
        $region19: #{tpu_custom_call.1} parent=11 // pred_region
          _
        $region20: #{tpu_custom_call.1} parent=11 // pred_fallthru
          _
      $region12: #{tpu_custom_call.1} parent=5 // pred_fallthru
        _
      %p142 = scmp.lt.s32.totalorder %s16, 2
      // Predicated region
      $region21: #{tpu_custom_call.1} parent=5 // pred_check
        %p143 = pneg %p142
      $region22: #{tpu_custom_call.1} parent=5 // pred_check_branch
        %145 = sbr.rel (%p143) target = $region24
      $region23: #{tpu_custom_call.1} parent=5 // pred_region
        // Predicated region
        $region25: #{tpu_custom_call.1} parent=23 // pred_check
          %p146 = pneg %p36
        $region26: #{tpu_custom_call.1} parent=23 // pred_check_branch
          %148 = sbr.rel (%p146) target = $region28
        $region27: #{tpu_custom_call.1} parent=23 // pred_region
          %s149 = sand.u32 %s26, 1
          %s150 = scalar_lea.sflag [#allocation3], %s149
          %s151 = sand.u32 %s26, 1
          %s152 = smul.addr %s151, 8
          %s153 = scalar_lea.vmem [#allocation2], %s152
          %155 = vsyncadd %s150, 0
          %s156 = smul.addr %s16, 8
          %s157 = scalar_lea.hbm %s0, %s156
          %s159 = sshll.u32 %s157, 4
          %s160 = int_to_ptr.hbm [resolvable:$true] %s159
          %s161 = sshll.u32 %s153, 4
          %s162 = int_to_ptr.vmem [resolvable:$true] %s161
          %164 = dma.hbm_to_vmem [thread:$0]  %s160, 128, %s162, %s150
        $region28: #{tpu_custom_call.1} parent=23 // pred_fallthru
          _
      $region24: #{tpu_custom_call.1} parent=5 // pred_fallthru
        _
      %p165 = scmp.le.s32.totalorder 1, %s16
      %p166 = scmp.lt.s32.totalorder %s16, 3
      %p167 = pnand %p165, %p166
      %p168 = pneg %p167
      // Predicated region
      $region29: #{tpu_custom_call.1} parent=5 // pred_check
        _
      $region30: #{tpu_custom_call.1} parent=5 // pred_check_branch
        %170 = sbr.rel (%p167) target = $region32
      $region31: #{tpu_custom_call.1} parent=5 // pred_region
        %s171 = ssub.s32 %s16, 1
        %s172 = sand.u32 %s29, 1
        %s173 = scalar_lea.sflag [#allocation3], %s172
        %s174 = sand.u32 %s29, 1
        %s175 = smul.addr %s174, 8
        %s176 = scalar_lea.vmem [#allocation2], %s175
        // Predicated region
        $region33: #{tpu_custom_call.1} parent=31 // pred_check
          %p177 = pneg %p42
        $region34: #{tpu_custom_call.1} parent=31 // pred_check_branch
          %179 = sbr.rel (%p177) target = $region36
        $region35: #{tpu_custom_call.1} parent=31 // pred_region
          %181 = dma.done %s173, 128
        $region36: #{tpu_custom_call.1} parent=31 // pred_fallthru
          _
        // Predicated region
        $region37: #{tpu_custom_call.1} parent=31 // pred_check
          %p182 = pneg %p63
        $region38: #{tpu_custom_call.1} parent=31 // pred_check_branch
          %184 = sbr.rel (%p182) target = $region40
        $region39: #{tpu_custom_call.1} parent=31 // pred_region
          %186 = dma.done [#allocation6], 2048
        $region40: #{tpu_custom_call.1} parent=31 // pred_fallthru
          _
        %s187 = sand.u32 %s29, 1
        %s188 = scalar_lea.sflag [#allocation3], %s187
        %s189 = sand.u32 %s29, 1
        %s190 = smul.addr %s189, 8
        %s191 = scalar_lea.vmem [#allocation2], %s190
        %p192 = pneg %p42
        %p193 = pneg %p39
        %p194 = pneg %p63
        %p195 = pneg %p60
        %p196 = pneg %p84
        %p197 = pneg %p81
        %p198 = pneg %p110
        %p199 = pneg %p107
        %s200 = sand.u32 %s97, 1
        %s201 = scalar_lea.sflag [#allocation4], %s200
        %s202 = sand.u32 %s97, 1
        %s203 = smul.addr %s202, 8
        %s204 = scalar_lea.vmem [#allocation7], %s203
        %v205 = vld [vmem:[%s176] sm:$0xff]
        %206 = vadd.xlane.f32.xlu0 %v205
        %v207 = vpop.xlane.xlu0 %206
        %v208 = vmul.f32 %v207, 0.03125
        %v209 = vlaneseq
        %v210 = vand.u32 %v209, 127
        %vm211 = vcmp.lt.s32.totalorder %v210, 32
        %v212 = vsub.f32 %v205, %v208
        %v213 = vsel %vm211, %v212, 0.0
        %v214 = vmul.f32 %v213, %v213
        %215 = vadd.xlane.f32.xlu0 %v214
        %v216 = vpop.xlane.xlu0 %215
        %v217 = vmul.f32 %v216, 0.03125
        %v218 = vadd.f32 %v217, 1e-05
        %v219 = vrsqrt.pop %v218
        %v220 = vmul.f32 %v219, %v218
        %v221 = vmul.f32 %v220, %v219
        %v222 = vmul.f32 0.5, %v221
        %v223 = vsub.f32 1.5, %v222
        %v224 = vmul.f32 %v219, %v223
        %vm225 = vweird.f32 %v218
        %vm226 = vweird.f32 %v219
        %vm227 = vmor %vm225, %vm226
        %v228 = vsel %vm227, %v219, %v224
        %v229 = vmul.f32 %v213, %v228
        %v230 = vld [vmem:[#allocation5] sm:$0xff]
        %v231 = vld [vmem:[#allocation5 + $0x8] sm:$0xff]
        %v232 = vld [vmem:[#allocation5 + $0x10] sm:$0xff]
        %v233 = vld [vmem:[#allocation5 + $0x18] sm:$0xff]
        %v234 = vld [vmem:[#allocation5 + $0x20] sm:$0xff]
        %v235 = vld [vmem:[#allocation5 + $0x28] sm:$0xff]
        %v236 = vld [vmem:[#allocation5 + $0x30] sm:$0xff]
        %v237 = vld [vmem:[#allocation5 + $0x38] sm:$0xff]
        %v238 = vld [vmem:[#allocation5 + $0x40] sm:$0xff]
        %v239 = vld [vmem:[#allocation5 + $0x48] sm:$0xff]
        %v240 = vld [vmem:[#allocation5 + $0x50] sm:$0xff]
        %v241 = vld [vmem:[#allocation5 + $0x58] sm:$0xff]
        %v242 = vld [vmem:[#allocation5 + $0x60] sm:$0xff]
        %v243 = vld [vmem:[#allocation5 + $0x68] sm:$0xff]
        %v244 = vld [vmem:[#allocation5 + $0x70] sm:$0xff]
        %v245 = vld [vmem:[#allocation5 + $0x78] sm:$0xff]
        %v246 = vld [vmem:[%s2] sm:$0x1]
        %v248 = vperm.slane %v246, 0
        %250 = vmatpush.msra.mxu0 %v245
        %251 = vmatpush.msra.mxu0 %v244
        %252 = vmatpush.msra.mxu0 %v243
        %253 = vmatpush.msra.mxu0 %v242
        %254 = vmatpush.msra.mxu0 %v241
        %255 = vmatpush.msra.mxu0 %v240
        %256 = vmatpush.msra.mxu0 %v239
        %257 = vmatpush.msra.mxu0 %v238
        %258 = vmatpush.msra.mxu0 %v237
        %259 = vmatpush.msra.mxu0 %v236
        %260 = vmatpush.msra.mxu0 %v235
        %261 = vmatpush.msra.mxu0 %v234
        %262 = vmatpush.msra.mxu0 %v233
        %263 = vmatpush.msra.mxu0 %v232
        %264 = vmatpush.msra.mxu0 %v231
        %265 = vmatpush.msra.mxu0 %v230
        %266 = vmatmul.f32.gmra.mxu0 %v229
        %v267 = vpop.f32.mrf.mxu0
        %v268 = vadd.f32 %v248, %v267
        %269 = vdwg.mxu0
        %270 = vst [vmem:[%s204] sm:$0xff] %v268
        %s271 = sand.u32 %s97, 1
        %s272 = scalar_lea.sflag [#allocation4], %s271
        %s273 = sand.u32 %s97, 1
        %s274 = smul.addr %s273, 8
        %s275 = scalar_lea.vmem [#allocation7], %s274
        // Predicated region
        $region41: #{tpu_custom_call.1} parent=31 // pred_check
          %p276 = pneg %p107
        $region42: #{tpu_custom_call.1} parent=31 // pred_check_branch
          %278 = sbr.rel (%p276) target = $region44
        $region43: #{tpu_custom_call.1} parent=31 // pred_region
          %280 = vsyncadd %s272, 0
          %s281 = smul.addr %s21, 8
          %s282 = scalar_lea.hbm %s3, %s281
          %s284 = sshll.u32 %s275, 4
          %s285 = int_to_ptr.vmem [resolvable:$true] %s284
          %s286 = sshll.u32 %s282, 4
          %s287 = int_to_ptr.hbm [resolvable:$true] %s286
          %289 = dma.vmem_to_hbm [thread:$0]  %s285, 128, %s287, %s272
        $region44: #{tpu_custom_call.1} parent=31 // pred_fallthru
          _
      $region32: #{tpu_custom_call.1} parent=5 // pred_fallthru
        _
      %p290 = scmp.le.s32.totalorder 2, %s16
      // Predicated region
      $region45: #{tpu_custom_call.1} parent=5 // pred_check
        %p291 = pneg %p290
      $region46: #{tpu_custom_call.1} parent=5 // pred_check_branch
        %293 = sbr.rel (%p291) target = $region48
      $region47: #{tpu_custom_call.1} parent=5 // pred_region
        %s294 = ssub.s32 %s16, 2
        // Predicated region
        $region49: #{tpu_custom_call.1} parent=47 // pred_check
          %p295 = pneg %p113
        $region50: #{tpu_custom_call.1} parent=47 // pred_check_branch
          %297 = sbr.rel (%p295) target = $region52
        $region51: #{tpu_custom_call.1} parent=47 // pred_region
          %s298 = sand.u32 %s98, 1
          %s299 = scalar_lea.sflag [#allocation4], %s298
          %s300 = sand.u32 %s98, 1
          %s301 = smul.addr %s300, 8
          %s302 = scalar_lea.vmem [#allocation7], %s301
          %304 = dma.done %s299, 128
        $region52: #{tpu_custom_call.1} parent=47 // pred_fallthru
          _
      $region48: #{tpu_custom_call.1} parent=5 // pred_fallthru
        _
    $region6: #{tpu_custom_call.1} parent=1 // loop_footer
      %s20 = sadd.s32 1, %s16
    $region7: #{tpu_custom_call.1} parent=1 // loop_footer_branch
      %15 = sbr.rel target = $region3
    $region8: #{tpu_custom_call.1} parent=1 // loop_exit
      _
    %305 = vsyncpa [#allocation3], 1
    %s306 = scalar_lea.sflag [#allocation3], 1
    %307 = vsyncpa %s306, 1
    %308 = vsyncpa [#allocation6], 1
    %309 = vsyncpa [#allocation4], 1
    %s310 = scalar_lea.sflag [#allocation4], 1
    %311 = vsyncpa %s310, 1

</llo_original>
